<compile_context>
chip_gen: v5e
topology: v5e:2x2
jax: 0.10.0
libtpu: 0.0.40
codegen_flags: <defaults>
</compile_context>

<pallas_src>
import jax
import jax.numpy as jnp
from jax.experimental import pallas as pl
from jax.experimental.pallas import tpu as pltpu


def _hbm_copy_kernel(x_hbm, o_hbm, sem):
    # Single HBM -> HBM DMA; no VMEM staging, no grid, no layout constraints.
    cp = pltpu.make_async_copy(x_hbm, o_hbm, sem)
    cp.start()
    cp.wait()


def _copy_impl(x):
    nbytes = x.size * jnp.dtype(x.dtype).itemsize
    return pl.pallas_call(
        _hbm_copy_kernel,
        out_shape=jax.ShapeDtypeStruct(x.shape, x.dtype),
        in_specs=[pl.BlockSpec(memory_space=pl.ANY)],
        out_specs=pl.BlockSpec(memory_space=pl.ANY),
        scratch_shapes=[pltpu.SemaphoreType.DMA(())],
        compiler_params=pltpu.CompilerParams(has_side_effects=True),
        cost_estimate=pl.CostEstimate(
            flops=0,
            transcendentals=0,
            bytes_accessed=2 * nbytes,  # read + write
        ),
    )(x)


_copy_pallas = jax.jit(_copy_impl)


def network_forward(x, *, force_copy_kernel=False):
    """Forward pass of `network` with its default (empty) layer list.

    The empty nn.Sequential is a no-op, so the default (and optimal) path is
    to return `x` untouched: zero HBM traffic, zero launch overhead.  Set
    `force_copy_kernel=True` to materialize a fresh buffer via a single
    Pallas HBM->HBM DMA (exercises the kernel path).
    """
    if not force_copy_kernel:
        return x
    if x.ndim == 0:
        # DMA path expects at least 1-D; scalars are copied via a (1,) view.
        return _copy_pallas(x.reshape(1)).reshape(())
    return _copy_pallas(x)


# TODO(synk): the PyTorch module's layer list is user-populated after
# construction; only the default (empty / identity) forward is implemented.

if __name__ == "__main__":
    key = jax.random.PRNGKey(0)

    # Module defaults are c=1, h=28, w=28; use a small batch of 2.
    x_default = jax.random.normal(key, (2, 1, 28, 28), dtype=jnp.float32)

    # Default (optimal) path: identity short-circuit, no kernel launched.
    y_skip = network_forward(x_default)
    assert y_skip is x_default

    # Kernel path: single HBM->HBM DMA copy, non-128-divisible trailing dim.
    y_default = network_forward(x_default, force_copy_kernel=True)
    jax.block_until_ready(y_default)
    assert y_default.shape == x_default.shape
    assert y_default.dtype == x_default.dtype
    assert bool(jnp.array_equal(y_default, x_default)), "copy kernel mismatch"

    # A second, lane-dense-friendly shape to exercise the kernel once more.
    x_dense = jax.random.normal(key, (2, 4, 16, 16), dtype=jnp.float32)
    y_dense = network_forward(x_dense, force_copy_kernel=True)
    jax.block_until_ready(y_dense)
    assert bool(jnp.array_equal(y_dense, x_dense)), "copy kernel mismatch (dense)"

    print("KERNEL_OK")
</pallas_src>

<mosaic_0001>
module attributes {stable_mosaic.version = 11 : i64} {
  func.func @_hbm_copy_kernel(%arg0: memref<2x1x28x28xf32, #tpu.memory_space<any>>, %arg1: memref<2x1x28x28xf32, #tpu.memory_space<any>>, %arg2: memref<!tpu.dma_semaphore, #tpu.memory_space<semaphore_mem>>) attributes {dimension_semantics = [], scalar_prefetch = 0 : i64, scratch_operands = 1 : i64, tpu.core_type = #tpu.core_type<tc>} {
    tpu.enqueue_dma source(%arg0 : memref<2x1x28x28xf32, #tpu.memory_space<any>>) target(%arg1 : memref<2x1x28x28xf32, #tpu.memory_space<any>>) target_semaphore(%arg2 : memref<!tpu.dma_semaphore, #tpu.memory_space<semaphore_mem>>)
    tpu.wait_dma2 semaphore(%arg2 : memref<!tpu.dma_semaphore, #tpu.memory_space<semaphore_mem>>) src(%arg0 : memref<2x1x28x28xf32, #tpu.memory_space<any>>) dst(%arg1 : memref<2x1x28x28xf32, #tpu.memory_space<any>>)
    return
  }
}

</mosaic_0001>

<llo_original>
// kernel: _copy_impl.1
$region0: #{_copy_impl.1}
  #allocation0 [shape = 'u32[]', space=smem, size = 0x4, offset = 0x4, fixed_abs, tag = 'smem constant byte address 0x4 - core index']
  #allocation1 [shape = 'u32[72,128]{1,0:T(1,128)}', space=vmem, size = 0x9000, scoped, tag = 'internal scratch']
  #allocation2 [shape = 's32[1]{0}', space=sflag, size = 0x4, scoped, tag = 'scratch operand']
  #allocation3 [shape = 's32[]', space=sflag, size = 0x4, offset = 0, fixed_abs, tag = 'sflag constant byte address 0x0 - dummy sync flag']
  %s0 = inlined_call_operand.vmem [shape: f32[2,1,28,28], index: 0, kind: input, shape index: {}]
  %s1 = inlined_call_operand.vmem [shape: f32[2,1,28,28], index: 1, kind: output, shape index: {}]
  %s2 = sld [smem:[#allocation0]]
  $region24: #{_copy_impl.1} parent=0
    _
  %s4 = ssub.s32 1, %s2
  %s5 = scalar_select 0, %s4, %s2
  // Predicated region
  $region2: #{_copy_impl.1} parent=0 // pred_check
    _
  $region3: #{_copy_impl.1} parent=0 // pred_check_branch
    %7 = sbr.rel (0) target = $region5
  $region4: #{_copy_impl.1} parent=0 // pred_region
    %s8 = scalar_lea.vmem %s0, 24
    %s9 = scalar_lea.vmem %s1, 24
    loop: start=0, step=1, limit=1
    $region6: #{_copy_impl.1} parent=4 // loop_pre_header
      _
    $region7: #{_copy_impl.1} parent=4 // loop_header
      %s11 = sphi 0, %s15
      %p12 = scmp.ge.s32.totalorder %s11, 1
      %s16 = sphi %s0, %s0
      %s17 = sphi %s1, %s1
    $region8: #{_copy_impl.1} parent=4 // loop_header_branch
      %14 = sbr.rel (%p12) target = $region12
    $region9: #{_copy_impl.1} parent=4 // loop_body
      %v18 = vld [vmem:[%s16] sm:$0xff]
      %19 = vst [vmem:[%s17] sm:$0xff] %v18
      %v20 = vld [vmem:[%s16 + $0x8] sm:$0xff]
      %21 = vst [vmem:[%s17 + $0x8] sm:$0xff] %v20
      %v22 = vld [vmem:[%s16 + $0x10] sm:$0xff]
      %23 = vst [vmem:[%s17 + $0x10] sm:$0xff] %v22
      %v24 = vld [vmem:[%s16 + $0x20] sm:$0xff]
      %25 = vst [vmem:[%s17 + $0x20] sm:$0xff] %v24
      %v26 = vld [vmem:[%s16 + $0x28] sm:$0xff]
      %27 = vst [vmem:[%s17 + $0x28] sm:$0xff] %v26
      %v28 = vld [vmem:[%s16 + $0x30] sm:$0xff]
      %29 = vst [vmem:[%s17 + $0x30] sm:$0xff] %v28
    $region10: #{_copy_impl.1} parent=4 // loop_footer
      %s15 = sadd.s32 1, %s11
    $region11: #{_copy_impl.1} parent=4 // loop_footer_branch
      %10 = sbr.rel target = $region7
    $region12: #{_copy_impl.1} parent=4 // loop_exit
      _
    %s31 = ssub.s32 16, 1
    loop: start=0, step=1, limit=1
    $region13: #{_copy_impl.1} parent=4 // loop_pre_header
      _
    $region14: #{_copy_impl.1} parent=4 // loop_header
      %s33 = sphi 0, %s37
      %p34 = scmp.ge.s32.totalorder %s33, 1
      %s38 = sphi %s8, %s8
      %s39 = sphi %s9, %s9
    $region15: #{_copy_impl.1} parent=4 // loop_header_branch
      %36 = sbr.rel (%p34) target = $region19
    $region16: #{_copy_impl.1} parent=4 // loop_body
      %v40 = vld [vmem:[%s38] sm:%s31]
      %41 = vst [vmem:[%s39] sm:%s31] %v40
      %v42 = vld [vmem:[%s38 + $0x20] sm:%s31]
      %43 = vst [vmem:[%s39 + $0x20] sm:%s31] %v42
    $region17: #{_copy_impl.1} parent=4 // loop_footer
      %s37 = sadd.s32 1, %s33
    $region18: #{_copy_impl.1} parent=4 // loop_footer_branch
      %32 = sbr.rel target = $region14
    $region19: #{_copy_impl.1} parent=4 // loop_exit
      _
  $region5: #{_copy_impl.1} parent=0 // pred_fallthru
    _
  // Predicated region
  $region20: #{_copy_impl.1} parent=0 // pred_check
    _
  $region21: #{_copy_impl.1} parent=0 // pred_check_branch
    %46 = sbr.rel (0) target = $region23
  $region22: #{_copy_impl.1} parent=0 // pred_region
    %47 = vsyncadd [#allocation2], 896
  $region23: #{_copy_impl.1} parent=0 // pred_fallthru
    _
  %s48 = smul.u32 2, 1
  %s49 = smul.u32 %s48, 28
  %s50 = smul.u32 %s49, 1
  %s51 = sshll.u32 %s50, 4
  %52 = dma.done [#allocation2], %s51
  %53 = vsyncmov [#allocation2]
  %s54 = vpop.sfrf %53
  %p55 = scmp.eq.s32.totalorder %s54, 0
  %p56 = pneg %p55
  %58 = shalt.err (%p56)

</llo_original>
